<compile_context>
chip_gen: v6e
topology: v6e:2x2x1
jax: 0.10.0
libtpu: 0.0.40
codegen_flags: <defaults>
</compile_context>

<pallas_src>
import functools

import jax
import jax.numpy as jnp
from jax.experimental import pallas as pl
from jax.experimental.pallas import tpu as pltpu

_NEG_BIG = -1e30   # finite "minus infinity" used for class-dim padding


# ---------------------------------------------------------------------------
# Kernels
# ---------------------------------------------------------------------------
def _kd_kernel_single(ys_ref, yt_ref, out_ref, *, inv_T):
    """nc==1 fast path: one class tile covers all of C, no streaming stats."""
    ys = ys_ref[...].astype(jnp.float32)
    yt = yt_ref[...].astype(jnp.float32)

    m_s = jnp.max(ys, axis=-1, keepdims=True)
    m_t = jnp.max(yt, axis=-1, keepdims=True)
    e_s = jnp.exp((ys - m_s) * inv_T)
    e_t = jnp.exp((yt - m_t) * inv_T)
    s_s = jnp.sum(e_s, axis=-1, keepdims=True)
    s_t = jnp.sum(e_t, axis=-1, keepdims=True)
    a = jnp.sum(e_t * (yt - ys), axis=-1, keepdims=True)

    out_ref[...] = (a * inv_T) * pl.reciprocal(s_t, approx=False) - (
        (m_t - m_s) * inv_T + jnp.log(s_t) - jnp.log(s_s))


def _kd_kernel_stream(ys_ref, yt_ref, out_ref,
                      m_s_sc, m_t_sc, s_s_sc, s_t_sc, a_sc, *, inv_T):
    """Online-softmax KL over class tiles; per-row kl written at last tile."""
    ci = pl.program_id(1)
    last_c = pl.num_programs(1) - 1

    ys = ys_ref[...].astype(jnp.float32)          # (TB, TC)
    yt = yt_ref[...].astype(jnp.float32)

    @pl.when(ci == 0)
    def _init():
        m_s_sc[...] = jnp.full_like(m_s_sc, -jnp.inf)
        m_t_sc[...] = jnp.full_like(m_t_sc, -jnp.inf)
        s_s_sc[...] = jnp.zeros_like(s_s_sc)
        s_t_sc[...] = jnp.zeros_like(s_t_sc)
        a_sc[...] = jnp.zeros_like(a_sc)

    # Running per-row maxima (on raw logits; 1/T folded into the exponent).
    m_s_new = jnp.maximum(m_s_sc[...], jnp.max(ys, axis=-1, keepdims=True))
    m_t_new = jnp.maximum(m_t_sc[...], jnp.max(yt, axis=-1, keepdims=True))

    # Rescale factors for previously accumulated sums (exp(-inf)=0 at ci==0).
    c_s = jnp.exp((m_s_sc[...] - m_s_new) * inv_T)
    c_t = jnp.exp((m_t_sc[...] - m_t_new) * inv_T)

    e_s = jnp.exp((ys - m_s_new) * inv_T)
    e_t = jnp.exp((yt - m_t_new) * inv_T)

    s_s_sc[...] = c_s * s_s_sc[...] + jnp.sum(e_s, axis=-1, keepdims=True)
    s_t_sc[...] = c_t * s_t_sc[...] + jnp.sum(e_t, axis=-1, keepdims=True)
    a_sc[...] = c_t * a_sc[...] + jnp.sum(e_t * (yt - ys), axis=-1, keepdims=True)

    m_s_sc[...] = m_s_new
    m_t_sc[...] = m_t_new

    @pl.when(ci == last_c)
    def _finalize():
        out_ref[...] = (a_sc[...] * inv_T) * pl.reciprocal(
            s_t_sc[...], approx=False) - (
            (m_t_sc[...] - m_s_sc[...]) * inv_T
            + jnp.log(s_t_sc[...]) - jnp.log(s_s_sc[...]))


# ---------------------------------------------------------------------------
# Tile picking / wrapper
# ---------------------------------------------------------------------------
def _vmem_capacity_bytes():
    try:
        return int(pltpu.get_tpu_info().vmem_capacity_bytes)
    except Exception:
        return 64 << 20     # conservative (v7x-sized) default if query fails


def _largest_aligned_divisor(dim, unit, cap):
    """Largest multiple of `unit` dividing `dim`, with value <= cap.

    `dim` must already be a multiple of `unit` (guaranteed by wrapper padding).
    """
    cap = max(unit, min(cap, dim))
    best = unit
    cand = unit
    while cand <= cap:
        if dim % cand == 0:
            best = cand
        cand += unit
    return best


def _pick_tiles(B_pad, C_pad, itemsize, vmem_cap):
    """Generation- and dtype-aware tile picker.

    Blocks are sized in INPUT-dtype bytes (pipeline buffers live in the input
    dtype; the f32 upcast happens post-DMA).  128-MiB-VMEM parts (v5e/v6e) get
    larger blocks than 64-MiB parts (v7x); headroom for the f32 intermediates
    is accounted for in the vmem_limit budget in the wrapper.
    """
    big_vmem = vmem_cap >= (96 << 20)
    max_block_io_bytes = (6 << 20) if big_vmem else (3 << 20)
    max_elems = max(8 * 128, max_block_io_bytes // itemsize)

    tc = _largest_aligned_divisor(C_pad, 128, max(128, max_elems // 8))

    tb_cap = max(8, max_elems // tc)
    # Megacore: keep >= 2 batch tiles so the 'parallel' batch axis can split
    # across both TensorCores on v7x (harmless on single-TC chips).
    if B_pad >= 16:
        tb_cap = min(tb_cap, max(8, (B_pad // 2) // 8 * 8))
    tb = _largest_aligned_divisor(B_pad, 8, tb_cap)
    return tb, tc


def distill_mbd_loss(y_s, y_t, T, coe=False, block_b=None, block_c=None):
    """Pallas implementation of Distill_MBD.forward (no 'w' kwarg)."""
    assert y_s.shape == y_t.shape and y_s.ndim == 2
    B, C = y_s.shape
    assert B > 0 and C > 0
    T = float(T)
    itemsize = jnp.dtype(y_s.dtype).itemsize

    # ---- pad to (8, 128)-aligned shapes so tiles are always bounded --------
    B_pad = -(-B // 8) * 8
    C_pad = -(-C // 128) * 128
    if C_pad != C:
        # Finite "-inf": exp underflows to exactly 0 for both tensors and the
        # (y_t - y_s) factor is exactly 0 => padded classes contribute nothing.
        y_s = jnp.pad(y_s, ((0, 0), (0, C_pad - C)), constant_values=_NEG_BIG)
        y_t = jnp.pad(y_t, ((0, 0), (0, C_pad - C)), constant_values=_NEG_BIG)
    if B_pad != B:
        # Identical padded rows => per-row KL == 0, contributes nothing.
        y_s = jnp.pad(y_s, ((0, B_pad - B), (0, 0)))
        y_t = jnp.pad(y_t, ((0, B_pad - B), (0, 0)))

    vmem_cap = _vmem_capacity_bytes()
    auto_tb, auto_tc = _pick_tiles(B_pad, C_pad, itemsize, vmem_cap)
    tb = block_b if block_b is not None else auto_tb
    tc = block_c if block_c is not None else auto_tc
    assert B_pad % tb == 0 and C_pad % tc == 0, (B_pad, C_pad, tb, tc)
    nb, nc = B_pad // tb, C_pad // tc

    # 'batchmean' divides by B; 'mean' (coe path) divides by B*C (unpadded).
    denom = float(B * C) if coe else float(B)

    # VMEM ask: 2 inputs x 2 pipeline buffers (input dtype) + ~4 f32 blocks of
    # in-kernel intermediates (upcasts, e_s/e_t) + headroom; never exceed ~80%
    # of this generation's physical VMEM.
    block_elems = tb * tc
    budget = 4 * block_elems * itemsize + 4 * block_elems * 4 + (4 << 20)
    vmem_limit = min(max(32 << 20, budget), int(vmem_cap * 0.8))

    cost = pl.CostEstimate(
        flops=int(10 * B_pad * C_pad),
        transcendentals=int(2 * B_pad * C_pad),
        bytes_accessed=int(2 * B_pad * C_pad * itemsize + B_pad * 4),
    )
    inv_T = 1.0 / T
    out_shape = jax.ShapeDtypeStruct((B_pad, 1), jnp.float32)

    if nc == 1:
        # Common case: all of C fits one class tile -> skip the online rescale
        # and the five per-row scratch accumulators entirely.
        row_kl = pl.pallas_call(
            functools.partial(_kd_kernel_single, inv_T=inv_T),
            out_shape=out_shape,
            grid_spec=pltpu.PrefetchScalarGridSpec(
                num_scalar_prefetch=0,
                grid=(nb,),
                in_specs=[
                    pl.BlockSpec((tb, tc), lambda bi: (bi, 0)),
                    pl.BlockSpec((tb, tc), lambda bi: (bi, 0)),
                ],
                out_specs=pl.BlockSpec((tb, 1), lambda bi: (bi, 0)),
            ),
            compiler_params=pltpu.CompilerParams(
                dimension_semantics=("parallel",),
                vmem_limit_bytes=vmem_limit,
            ),
            cost_estimate=cost,
        )(y_s, y_t)
    else:
        row_kl = pl.pallas_call(
            functools.partial(_kd_kernel_stream, inv_T=inv_T),
            out_shape=out_shape,
            grid_spec=pltpu.PrefetchScalarGridSpec(
                num_scalar_prefetch=0,
                grid=(nb, nc),
                in_specs=[
                    pl.BlockSpec((tb, tc), lambda bi, ci: (bi, ci)),
                    pl.BlockSpec((tb, tc), lambda bi, ci: (bi, ci)),
                ],
                out_specs=pl.BlockSpec((tb, 1), lambda bi, ci: (bi, 0)),
                scratch_shapes=[pltpu.VMEM((tb, 1), jnp.float32)] * 5,
            ),
            compiler_params=pltpu.CompilerParams(
                dimension_semantics=("parallel", "arbitrary"),
                vmem_limit_bytes=vmem_limit,
            ),
            cost_estimate=cost,
        )(y_s, y_t)

    # Tiny batch-direction reduction + T^2 / denom scaling in the wrapper.
    # (Padded rows contribute exactly 0 to the sum.)
    return jnp.sum(row_kl) * (T ** 2 / denom)


# ---------------------------------------------------------------------------
# Pure-JAX reference + self-test
# ---------------------------------------------------------------------------
def _reference_loss(y_s, y_t, T, coe=False):
    """Pure-JAX reference mirroring the PyTorch forward."""
    ys = y_s.astype(jnp.float32) / T
    yt = y_t.astype(jnp.float32) / T
    log_ps = jax.nn.log_softmax(ys, axis=1)
    p_t = jax.nn.softmax(yt, axis=1)
    log_pt = jax.nn.log_softmax(yt, axis=1)
    kl = jnp.where(p_t > 0.0, p_t * (log_pt - log_ps), 0.0)
    denom = y_s.shape[0] * y_s.shape[1] if coe else y_s.shape[0]
    return jnp.sum(kl) * (T ** 2) / denom


if __name__ == "__main__":
    key = jax.random.PRNGKey(0)
    keys = jax.random.split(key, 8)

    # --- case 1: single-tile (8x128), f32, both reductions (nc==1 path) ---
    B, C, T = 8, 128, 4.0
    y_s = jax.random.normal(keys[0], (B, C), dtype=jnp.float32)
    y_t = jax.random.normal(keys[1], (B, C), dtype=jnp.float32)
    loss = distill_mbd_loss(y_s, y_t, T)                  # 'batchmean'
    loss_coe = distill_mbd_loss(y_s, y_t, T, coe=True)    # 'coe' -> 'mean'
    jax.block_until_ready((loss, loss_coe))
    ref = _reference_loss(y_s, y_t, T)
    ref_coe = _reference_loss(y_s, y_t, T, coe=True)
    assert jnp.allclose(loss, ref, rtol=1e-4, atol=1e-5), (loss, ref)
    assert jnp.allclose(loss_coe, ref_coe, rtol=1e-4, atol=1e-5), (loss_coe, ref_coe)

    # --- case 2: forced multi-tile grid -> online-softmax streaming path ---
    B2, C2, T2 = 32, 512, 2.0
    y_s2 = 3.0 * jax.random.normal(keys[2], (B2, C2), dtype=jnp.float32)
    y_t2 = 3.0 * jax.random.normal(keys[3], (B2, C2), dtype=jnp.float32)
    loss2 = distill_mbd_loss(y_s2, y_t2, T2, block_b=8, block_c=128)
    jax.block_until_ready(loss2)
    ref2 = _reference_loss(y_s2, y_t2, T2)
    assert jnp.allclose(loss2, ref2, rtol=1e-4, atol=1e-5), (loss2, ref2)

    # --- case 3: bf16 logits (in-kernel upcast, dtype-aware tiling) ---
    B3, C3, T3 = 16, 256, 4.0
    y_s3 = jax.random.normal(keys[4], (B3, C3), dtype=jnp.float32).astype(jnp.bfloat16)
    y_t3 = jax.random.normal(keys[5], (B3, C3), dtype=jnp.float32).astype(jnp.bfloat16)
    loss3 = distill_mbd_loss(y_s3, y_t3, T3)
    jax.block_until_ready(loss3)
    ref3 = _reference_loss(y_s3, y_t3, T3)
    assert jnp.allclose(loss3, ref3, rtol=1e-3, atol=1e-4), (loss3, ref3)

    # --- case 4: unaligned B/C -> wrapper padding, single-pass + streaming ---
    B4, C4, T4 = 6, 130, 3.0
    y_s4 = jax.random.normal(keys[6], (B4, C4), dtype=jnp.float32)
    y_t4 = jax.random.normal(keys[7], (B4, C4), dtype=jnp.float32)
    loss4 = distill_mbd_loss(y_s4, y_t4, T4)                  # padded, nc==1
    loss4s = distill_mbd_loss(y_s4, y_t4, T4, block_c=128)    # padded, streaming
    jax.block_until_ready((loss4, loss4s))
    ref4 = _reference_loss(y_s4, y_t4, T4)
    assert jnp.allclose(loss4, ref4, rtol=1e-4, atol=1e-5), (loss4, ref4)
    assert jnp.allclose(loss4s, ref4, rtol=1e-4, atol=1e-5), (loss4s, ref4)

    print("KERNEL_OK")
</pallas_src>

<mosaic_0001>
module attributes {stable_mosaic.version = 11 : i64} {
  func.func @_kd_kernel_single(%arg0: i32, %arg1: memref<8x128xf32, #tpu.memory_space<vmem>>, %arg2: memref<8x128xf32, #tpu.memory_space<vmem>>, %arg3: memref<8x1xf32, #tpu.memory_space<vmem>>) attributes {dimension_semantics = [#tpu.dimension_semantics<parallel>], iteration_bounds = array<i64: 1>, scalar_prefetch = 0 : i64, scratch_operands = 0 : i64, tpu.core_type = #tpu.core_type<tc>, window_params = [{transform_indices = @transform_0, window_bounds = array<i64: 8, 128>}, {transform_indices = @transform_1, window_bounds = array<i64: 8, 128>}, {transform_indices = @transform_2, window_bounds = array<i64: 8, 1>}]} {
    %c0 = arith.constant 0 : index
    %c0_0 = arith.constant 0 : index
    %0 = vector.load %arg1[%c0, %c0_0] : memref<8x128xf32, #tpu.memory_space<vmem>>, vector<8x128xf32>
    %c0_1 = arith.constant 0 : index
    %c0_2 = arith.constant 0 : index
    %1 = vector.load %arg2[%c0_1, %c0_2] : memref<8x128xf32, #tpu.memory_space<vmem>>, vector<8x128xf32>
    %cst = arith.constant dense<0xFF800000> : vector<8xf32>
    %2 = vector.multi_reduction <maximumf>, %0, %cst [1] : vector<8x128xf32> to vector<8xf32>
    %3 = vector.shape_cast %2 : vector<8xf32> to vector<8x1xf32>
    %cst_3 = arith.constant dense<0xFF800000> : vector<8xf32>
    %4 = vector.multi_reduction <maximumf>, %1, %cst_3 [1] : vector<8x128xf32> to vector<8xf32>
    %5 = vector.shape_cast %4 : vector<8xf32> to vector<8x1xf32>
    %6 = vector.broadcast %3 : vector<8x1xf32> to vector<8x128xf32>
    %7 = arith.subf %0, %6 : vector<8x128xf32>
    %cst_4 = arith.constant 2.500000e-01 : f32
    %8 = vector.broadcast %cst_4 : f32 to vector<8x128xf32>
    %9 = arith.mulf %7, %8 : vector<8x128xf32>
    %10 = math.exp %9 : vector<8x128xf32>
    %11 = vector.broadcast %5 : vector<8x1xf32> to vector<8x128xf32>
    %12 = arith.subf %1, %11 : vector<8x128xf32>
    %cst_5 = arith.constant 2.500000e-01 : f32
    %13 = vector.broadcast %cst_5 : f32 to vector<8x128xf32>
    %14 = arith.mulf %12, %13 : vector<8x128xf32>
    %15 = math.exp %14 : vector<8x128xf32>
    %cst_6 = arith.constant dense<0.000000e+00> : vector<8xf32>
    %16 = vector.multi_reduction <add>, %10, %cst_6 [1] : vector<8x128xf32> to vector<8xf32>
    %17 = vector.shape_cast %16 : vector<8xf32> to vector<8x1xf32>
    %cst_7 = arith.constant dense<0.000000e+00> : vector<8xf32>
    %18 = vector.multi_reduction <add>, %15, %cst_7 [1] : vector<8x128xf32> to vector<8xf32>
    %19 = vector.shape_cast %18 : vector<8xf32> to vector<8x1xf32>
    %20 = arith.subf %1, %0 : vector<8x128xf32>
    %21 = arith.mulf %15, %20 : vector<8x128xf32>
    %cst_8 = arith.constant dense<0.000000e+00> : vector<8xf32>
    %22 = vector.multi_reduction <add>, %21, %cst_8 [1] : vector<8x128xf32> to vector<8xf32>
    %23 = vector.shape_cast %22 : vector<8xf32> to vector<8x1xf32>
    %cst_9 = arith.constant 2.500000e-01 : f32
    %24 = vector.broadcast %cst_9 : f32 to vector<8x1xf32>
    %25 = arith.mulf %23, %24 : vector<8x1xf32>
    %26 = tpu.reciprocal %19 : vector<8x1xf32> -> vector<8x1xf32>
    %27 = arith.mulf %25, %26 : vector<8x1xf32>
    %28 = arith.subf %5, %3 : vector<8x1xf32>
    %cst_10 = arith.constant 2.500000e-01 : f32
    %29 = vector.broadcast %cst_10 : f32 to vector<8x1xf32>
    %30 = arith.mulf %28, %29 : vector<8x1xf32>
    %31 = math.log %19 : vector<8x1xf32>
    %32 = arith.addf %30, %31 : vector<8x1xf32>
    %33 = math.log %17 : vector<8x1xf32>
    %34 = arith.subf %32, %33 : vector<8x1xf32>
    %35 = arith.subf %27, %34 : vector<8x1xf32>
    %c0_11 = arith.constant 0 : index
    %c0_12 = arith.constant 0 : index
    %36 = vector.load %arg3[%c0_11, %c0_12] : memref<8x1xf32, #tpu.memory_space<vmem>>, vector<8x1xf32>
    tpu.vector_store %arg3[%c0_11, %c0_12], %35 {strides = array<i32>} : memref<8x1xf32, #tpu.memory_space<vmem>>, vector<8x1xf32>,
    return
  }
  func.func @transform_0(%arg0: i32) -> (i32, i32) {
    %c0_i32 = arith.constant 0 : i32
    %c0_i32_0 = arith.constant 0 : i32
    return %arg0, %c0_i32 : i32, i32
  }
  func.func @transform_1(%arg0: i32) -> (i32, i32) {
    %c0_i32 = arith.constant 0 : i32
    %c0_i32_0 = arith.constant 0 : i32
    return %arg0, %c0_i32 : i32, i32
  }
  func.func @transform_2(%arg0: i32) -> (i32, i32) {
    %c0_i32 = arith.constant 0 : i32
    %c0_i32_0 = arith.constant 0 : i32
    return %arg0, %c0_i32 : i32, i32
  }
}

</mosaic_0001>

<llo_original>
// kernel: tpu_custom_call.1
$region0: #{tpu_custom_call.1}
  #allocation0 [shape = 'u32[]', space=smem, size = 0x4, offset = 0x4, fixed_abs, tag = 'smem constant byte address 0x4 - core index']
  #allocation1 [shape = 'u32[144,128]{1,0:T(1,128)}', space=vmem, size = 0x12000, scoped, tag = 'internal scratch']
  %s0 = inlined_call_operand.hbm [shape: f32[8,128], index: 0, kind: input, shape index: {}]
  %s1 = inlined_call_operand.hbm [shape: f32[8,128], index: 1, kind: input, shape index: {}]
  %s2 = inlined_call_operand.vmem [shape: f32[8,1], index: 2, kind: output, shape index: {}]
  %s3 = sld [smem:[#allocation0]]
  $region26: #{tpu_custom_call.1} parent=0
    _
  %s5 = ssub.s32 1, %s3
  %s6 = scalar_select 0, %s5, %s3
  $region1: #{tpu_custom_call.1} parent=0
    #allocation2 [shape = 'u8[4096]{0}', space=vmem, size = 0x1000, scoped, tag = 'input window, operand 0, single buffered']
    #allocation3 [shape = 's32[1]{0}', space=sflag, size = 0x4, scoped, tag = 'scoped memory for tpu_custom_call.1']
    #allocation4 [shape = 'u8[4096]{0}', space=vmem, size = 0x1000, scoped, tag = 'input window, operand 1, single buffered']
    #allocation5 [shape = 's32[1]{0}', space=sflag, size = 0x4, scoped, tag = 'scoped memory for tpu_custom_call.1']
    %7 = vsyncpa [#allocation3], 0
    %8 = vsyncpa [#allocation5], 0
    // Predicated region
    $region2: #{tpu_custom_call.1} parent=1 // pred_check
      _
    $region3: #{tpu_custom_call.1} parent=1 // pred_check_branch
      %10 = sbr.rel (0) target = $region5
    $region4: #{tpu_custom_call.1} parent=1 // pred_region
      %s12 = ssub.s32 128, 128
      %13 = vsyncadd [#allocation3], %s12
      %s15 = sshll.u32 [#allocation2], 4
      %s16 = int_to_ptr.vmem [resolvable:$true] %s15
      %18 = dma.hbm_to_vmem [thread:$0]  %s0, 128, %s16, [#allocation3]
    $region5: #{tpu_custom_call.1} parent=1 // pred_fallthru
      _
    // Predicated region
    $region6: #{tpu_custom_call.1} parent=1 // pred_check
      _
    $region7: #{tpu_custom_call.1} parent=1 // pred_check_branch
      %20 = sbr.rel (0) target = $region9
    $region8: #{tpu_custom_call.1} parent=1 // pred_region
      %s22 = ssub.s32 128, 128
      %23 = vsyncadd [#allocation5], %s22
      %s25 = sshll.u32 [#allocation4], 4
      %s26 = int_to_ptr.vmem [resolvable:$true] %s25
      %28 = dma.hbm_to_vmem [thread:$0]  %s1, 128, %s26, [#allocation5]
    $region9: #{tpu_custom_call.1} parent=1 // pred_fallthru
      _
    // Predicated region
    $region10: #{tpu_custom_call.1} parent=1 // pred_check
      _
    $region11: #{tpu_custom_call.1} parent=1 // pred_check_branch
      %30 = sbr.rel (0) target = $region13
    $region12: #{tpu_custom_call.1} parent=1 // pred_region
      %31 = dma.done [#allocation3], 128
    $region13: #{tpu_custom_call.1} parent=1 // pred_fallthru
      _
    // Predicated region
    $region14: #{tpu_custom_call.1} parent=1 // pred_check
      _
    $region15: #{tpu_custom_call.1} parent=1 // pred_check_branch
      %33 = sbr.rel (0) target = $region17
    $region16: #{tpu_custom_call.1} parent=1 // pred_region
      %34 = dma.done [#allocation5], 128
    $region17: #{tpu_custom_call.1} parent=1 // pred_fallthru
      _
    %v35 = vld [vmem:[#allocation2] sm:$0xff]
    %v36 = vld [vmem:[#allocation4] sm:$0xff]
    %37 = vmax.xlane.f32.xlu0 %v35
    %v38 = vpop.xlane.xlu0 %37
    %39 = vmax.xlane.f32.xlu0 %v36
    %v40 = vpop.xlane.xlu0 %39
    %v41 = vsub.f32 %v35, %v38
    %v42 = vmul.f32 %v41, 0.25
    %v43 = vmul.f32 %v42, 1.442695
    %v44 = vpow.pop %v43
    %v45 = vsub.f32 %v36, %v40
    %v46 = vmul.f32 %v45, 0.25
    %v47 = vmul.f32 %v46, 1.442695
    %v48 = vpow.pop %v47
    %49 = vadd.xlane.f32.xlu0 %v44
    %v50 = vpop.xlane.xlu0 %49
    %51 = vadd.xlane.f32.xlu0 %v48
    %v52 = vpop.xlane.xlu0 %51
    %v53 = vsub.f32 %v36, %v35
    %v54 = vmul.f32 %v48, %v53
    %55 = vadd.xlane.f32.xlu0 %v54
    %v56 = vpop.xlane.xlu0 %55
    %v57 = vmul.f32 %v56, 0.25
    %v58 = vrcp.pop %v52
    %v59 = vmul.f32 %v57, %v58
    %v60 = vsub.f32 %v40, %v38
    %v61 = vmul.f32 %v60, 0.25
    %v62 = vlog2.pop %v52
    %v63 = vmul.f32 %v62, 0.6931472
    %v64 = vadd.f32 %v61, %v63
    %v65 = vlog2.pop %v50
    %v66 = vmul.f32 %v65, 0.6931472
    %v67 = vsub.f32 %v64, %v66
    %v68 = vsub.f32 %v59, %v67
    %vm69 = vcmask 7168
    %70 = vst.msk [vmem:[%s2] sm:$0xff] %vm69, %v68
    // Predicated region
    $region18: #{tpu_custom_call.1} parent=1 // pred_check
      _
    $region19: #{tpu_custom_call.1} parent=1 // pred_check_branch
      %72 = sbr.rel (0) target = $region21
    $region20: #{tpu_custom_call.1} parent=1 // pred_region
      _
    $region21: #{tpu_custom_call.1} parent=1 // pred_fallthru
      _
    // Predicated region
    $region22: #{tpu_custom_call.1} parent=1 // pred_check
      _
    $region23: #{tpu_custom_call.1} parent=1 // pred_check_branch
      %74 = sbr.rel (0) target = $region25
    $region24: #{tpu_custom_call.1} parent=1 // pred_region
      _
    $region25: #{tpu_custom_call.1} parent=1 // pred_fallthru
      _
    %75 = vsyncpa [#allocation3], 1
    %76 = vsyncpa [#allocation5], 1

</llo_original>
